<compile_context>
chip_gen: v6e
topology: v6e:2x2x1
jax: 0.10.0
libtpu: 0.0.40
codegen_flags: <defaults>
</compile_context>

<pallas_src>
import functools

import jax
import jax.numpy as jnp
from jax.experimental import pallas as pl
from jax.experimental.pallas import tpu as pltpu


# ---------------------------------------------------------------------------
# Single-step kernel: the module's forward(xt, state, att_features) verbatim.
# ---------------------------------------------------------------------------
def lstm_step_kernel(att_ref, xt_ref, hx_ref, cx_ref, w_ref, bias_ref,
                     out_ref, *, rnn_size):
    R = rnn_size

    # fc_feature = att_features.mean(1)  -- att is fed as (L, B, R) so the
    # pooled axis is leading: plain VPU adds over clean (8,128) slabs.
    fc = jnp.mean(att_ref[...].astype(jnp.float32), axis=0)            # (B, R)

    # [xt | hx | fc] assembled in-register (each piece is exactly a multiple of
    # 128 lanes -> no cross-lane movement, no VMEM scratch roundtrip); the
    # three Linear layers collapse into ONE bf16 MXU matmul, f32 accumulation.
    lhs = jnp.concatenate([xt_ref[...], hx_ref[...], fc],
                          axis=1).astype(jnp.bfloat16)                 # (B, E+2R)
    gates = (jnp.dot(lhs, w_ref[...], preferred_element_type=jnp.float32)
             + bias_ref[...])                                          # (B, 6R) f32

    # Gate order matches the PyTorch narrow() offsets: [i, f, o, s, c1, c2].
    sig = jax.nn.sigmoid(gates[:, 0:4 * R])
    in_gate     = sig[:, 0 * R:1 * R]
    forget_gate = sig[:, 1 * R:2 * R]
    out_gate    = sig[:, 2 * R:3 * R]
    s_gate      = sig[:, 3 * R:4 * R]
    cell = jnp.maximum(gates[:, 4 * R:5 * R], gates[:, 5 * R:6 * R])

    cx = cx_ref[...].astype(jnp.float32)
    cy = jnp.tanh(forget_gate * cx + in_gate * cell)   # returned cell state (per spec)
    hy = out_gate * cy
    sentinel = s_gate * cy
    # TODO(synk): F.dropout(p=drop_prob_lm) on hy/sentinel is identity in eval
    # mode; training-time stateful-PRNG dropout intentionally not applied.

    # Single lane-dense (B, 3R) writeback: [hy | cy | sentinel].
    out_ref[...] = jnp.concatenate([hy, cy, sentinel],
                                   axis=1).astype(out_ref.dtype)


def lstm_forward(xt, state, att_features, params):
    """Mirrors lstm.forward(xt, state, att_features) -> (hy, cy, sentinel)."""
    hx, cx = state
    B, E = xt.shape
    R = hx.shape[-1]
    L = att_features.shape[1]

    w_all, bias = params['w_all'], params['bias']

    # (B, L, R) -> (L, B, R): pooled axis leading, clean (8,128) lane tiles.
    att_lbr = jnp.transpose(att_features, (1, 0, 2))

    full = lambda shape: pl.BlockSpec(shape, lambda: tuple(0 for _ in shape))

    out = pl.pallas_call(
        functools.partial(lstm_step_kernel, rnn_size=R),
        out_shape=jax.ShapeDtypeStruct((B, 3 * R), jnp.float32),
        in_specs=[full((L, B, R)),             # att_features (pooled axis first)
                  full((B, E)),                # xt
                  full((B, R)),                # hx
                  full((B, R)),                # cx
                  full((E + 2 * R, 6 * R)),    # fused [w_word; w_h; w_img] bf16
                  full((1, 6 * R))],           # combined bias f32
        out_specs=full((B, 3 * R)),
    )(att_lbr, xt, hx, cx, w_all, bias)

    return out[:, 0:R], out[:, R:2 * R], out[:, 2 * R:3 * R]


# ---------------------------------------------------------------------------
# Sequence/decode kernel: grid=(T,), h2h weight resident in VMEM, state carried
# in VMEM scratch, constant image/attention path hoisted out of the loop.
# ---------------------------------------------------------------------------
def lstm_seq_kernel(inp_ref, wh_ref, h0_ref, c0_ref, out_ref,
                    h_sc, c_sc, *, rnn_size):
    R = rnn_size
    t = pl.program_id(0)

    @pl.when(t == 0)
    def _():
        h_sc[...] = h0_ref[...]
        c_sc[...] = c0_ref[...]

    # Per-step work is only the recurrent h2h matmul; word2h(xt)+image2h(fc)+b
    # were precomputed and stream in as inp_ref.  wh_ref has a constant
    # index_map so it is fetched once and stays resident (single-buffered).
    gates = (inp_ref[0, :, :]
             + jnp.dot(h_sc[...].astype(jnp.bfloat16), wh_ref[...],
                       preferred_element_type=jnp.float32))            # (B, 6R)

    sig = jax.nn.sigmoid(gates[:, 0:4 * R])
    in_gate     = sig[:, 0 * R:1 * R]
    forget_gate = sig[:, 1 * R:2 * R]
    out_gate    = sig[:, 2 * R:3 * R]
    s_gate      = sig[:, 3 * R:4 * R]
    cell = jnp.maximum(gates[:, 4 * R:5 * R], gates[:, 5 * R:6 * R])

    cy = jnp.tanh(forget_gate * c_sc[...] + in_gate * cell)
    hy = out_gate * cy
    sentinel = s_gate * cy

    # Carry state across grid steps in VMEM scratch (no HBM round-trip).
    h_sc[...] = hy
    c_sc[...] = cy

    out_ref[0, :, :] = jnp.concatenate([hy, cy, sentinel],
                                       axis=1).astype(out_ref.dtype)


def lstm_decode(xt_seq, state0, att_features, params):
    """Steps the cell over a whole decode sequence.

    xt_seq: (T, B, E); att_features (B, L, R) is fixed across decode steps.
    Returns (hy_seq, cy_seq, sent_seq), each (T, B, R).
    """
    h0, c0 = state0
    T, B, E = xt_seq.shape
    R = h0.shape[-1]

    # Hoisted constant path: fc = mean(att); image2h(fc) + summed biases once.
    fc = jnp.mean(att_features, axis=1)                                 # (B, R)
    img_gates = jnp.dot(fc.astype(jnp.bfloat16), params['w_img'],
                        preferred_element_type=jnp.float32)             # (B, 6R)
    # Input-side matmul over all T at once (M = T*B fills MXU rows).
    word_gates = jnp.dot(xt_seq.reshape(T * B, E).astype(jnp.bfloat16),
                         params['w_word'],
                         preferred_element_type=jnp.float32
                         ).reshape(T, B, 6 * R)
    inp_gates = word_gates + img_gates[None] + params['bias'][None]     # (T, B, 6R)

    out = pl.pallas_call(
        functools.partial(lstm_seq_kernel, rnn_size=R),
        out_shape=jax.ShapeDtypeStruct((T, B, 3 * R), jnp.float32),
        grid_spec=pltpu.PrefetchScalarGridSpec(
            num_scalar_prefetch=0,
            grid=(T,),
            in_specs=[
                pl.BlockSpec((1, B, 6 * R), lambda t: (t, 0, 0)),   # per-step gates
                pl.BlockSpec((R, 6 * R), lambda t: (0, 0)),         # h2h wt, resident
                pl.BlockSpec((B, R), lambda t: (0, 0)),             # h0
                pl.BlockSpec((B, R), lambda t: (0, 0)),             # c0
            ],
            out_specs=pl.BlockSpec((1, B, 3 * R), lambda t: (t, 0, 0)),
            scratch_shapes=[pltpu.VMEM((B, R), jnp.float32),        # carried h
                            pltpu.VMEM((B, R), jnp.float32)],       # carried c
        ),
        compiler_params=pltpu.CompilerParams(
            dimension_semantics=("arbitrary",)),   # recurrence is serial
    )(inp_gates, params['w_h'], h0, c0)

    return out[:, :, 0:R], out[:, :, R:2 * R], out[:, :, 2 * R:3 * R]


def init_params(key, input_encoding_size, rnn_size):
    """Deterministic synthetic parameters; bf16 weights stored (in, out)."""
    k1, k2, k3, k4, k5, k6 = jax.random.split(key, 6)
    E, R = input_encoding_size, rnn_size
    scale = 0.05
    w_word = (scale * jax.random.normal(k1, (E, 6 * R), jnp.float32)).astype(jnp.bfloat16)
    w_h    = (scale * jax.random.normal(k2, (R, 6 * R), jnp.float32)).astype(jnp.bfloat16)
    w_img  = (scale * jax.random.normal(k3, (R, 6 * R), jnp.float32)).astype(jnp.bfloat16)
    # word2h.bias + h2h.bias + image2h.bias collapse into one additive bias.
    bias = (scale * jax.random.normal(k4, (1, 6 * R), jnp.float32)
            + scale * jax.random.normal(k5, (1, 6 * R), jnp.float32)
            + scale * jax.random.normal(k6, (1, 6 * R), jnp.float32))
    return {
        'w_word': w_word, 'w_h': w_h, 'w_img': w_img, 'bias': bias,
        # Fused [w_word; w_h; w_img] along the input dim for the 1-step kernel.
        'w_all': jnp.concatenate([w_word, w_h, w_img], axis=0),
    }


if __name__ == "__main__":
    # Small shapes consistent with the module's forward pass.
    B, E, R, L, T = 8, 128, 128, 4, 6

    key = jax.random.PRNGKey(0)
    kx, kh, kc, ka, kp = jax.random.split(key, 5)

    xt_seq = jax.random.normal(kx, (T, B, E), jnp.float32)
    hx = jax.random.normal(kh, (B, R), jnp.float32)
    cx = jax.random.normal(kc, (B, R), jnp.float32)
    att_features = jax.random.normal(ka, (B, L, R), jnp.float32)
    params = init_params(kp, E, R)

    # --- single-step (the module's forward) --------------------------------
    hy1, cy1, sent1 = lstm_forward(xt_seq[0], (hx, cx), att_features, params)

    # --- sequence/decode version (weights resident in VMEM across T) -------
    hy_seq, cy_seq, sent_seq = lstm_decode(xt_seq, (hx, cx), att_features, params)
    jax.block_until_ready((hy1, cy1, sent1, hy_seq, cy_seq, sent_seq))

    # --- pure-JAX reference (eval mode, dropout = identity), mirroring the
    # kernels' bf16 operand rounding with f32 accumulation -------------------
    w_f32 = params['w_all'].astype(jnp.float32)
    bias = params['bias']
    fc = att_features.mean(axis=1)

    def ref_step(xt, h, c):
        lhs = jnp.concatenate([xt, h, fc], axis=1).astype(jnp.bfloat16).astype(jnp.float32)
        gates = lhs @ w_f32 + bias
        sig = jax.nn.sigmoid(gates[:, :4 * R])
        in_g, fg, og, sg = (sig[:, i * R:(i + 1) * R] for i in range(4))
        cell = jnp.maximum(gates[:, 4 * R:5 * R], gates[:, 5 * R:6 * R])
        cy_n = jnp.tanh(fg * c + in_g * cell)
        return og * cy_n, cy_n, sg * cy_n

    hy_r, cy_r, sent_r = ref_step(xt_seq[0], hx, cx)
    assert jnp.allclose(hy1, hy_r, atol=2e-3)
    assert jnp.allclose(cy1, cy_r, atol=2e-3)
    assert jnp.allclose(sent1, sent_r, atol=2e-3)

    h, c = hx, cx
    for t in range(T):
        hy_r, cy_r, sent_r = ref_step(xt_seq[t], h, c)
        assert jnp.allclose(hy_seq[t], hy_r, atol=2e-3)
        assert jnp.allclose(cy_seq[t], cy_r, atol=2e-3)
        assert jnp.allclose(sent_seq[t], sent_r, atol=2e-3)
        h, c = hy_r, cy_r

    print("KERNEL_OK")
</pallas_src>

<mosaic_0001>
module attributes {stable_mosaic.version = 11 : i64} {
  func.func @lstm_step_kernel(%arg0: memref<4x8x128xf32, #tpu.memory_space<vmem>>, %arg1: memref<8x128xf32, #tpu.memory_space<vmem>>, %arg2: memref<8x128xf32, #tpu.memory_space<vmem>>, %arg3: memref<8x128xf32, #tpu.memory_space<vmem>>, %arg4: memref<384x768xbf16, #tpu.memory_space<vmem>>, %arg5: memref<1x768xf32, #tpu.memory_space<vmem>>, %arg6: memref<8x384xf32, #tpu.memory_space<vmem>>) attributes {dimension_semantics = [], scalar_prefetch = 0 : i64, scratch_operands = 0 : i64, tpu.core_type = #tpu.core_type<tc>} {
    %c0 = arith.constant 0 : index
    %c0_0 = arith.constant 0 : index
    %c0_1 = arith.constant 0 : index
    %0 = vector.load %arg0[%c0, %c0_0, %c0_1] : memref<4x8x128xf32, #tpu.memory_space<vmem>>, vector<4x8x128xf32>
    %cst = arith.constant dense<0.000000e+00> : vector<8x128xf32>
    %1 = vector.multi_reduction <add>, %0, %cst [0] : vector<4x8x128xf32> to vector<8x128xf32>
    %cst_2 = arith.constant 4.000000e+00 : f32
    %2 = vector.broadcast %cst_2 : f32 to vector<8x128xf32>
    %3 = arith.divf %1, %2 : vector<8x128xf32>
    %c0_3 = arith.constant 0 : index
    %c0_4 = arith.constant 0 : index
    %4 = vector.load %arg1[%c0_3, %c0_4] : memref<8x128xf32, #tpu.memory_space<vmem>>, vector<8x128xf32>
    %c0_5 = arith.constant 0 : index
    %c0_6 = arith.constant 0 : index
    %5 = vector.load %arg2[%c0_5, %c0_6] : memref<8x128xf32, #tpu.memory_space<vmem>>, vector<8x128xf32>
    %6 = tpu.concatenate %4, %5, %3 in 1 : vector<8x128xf32>, vector<8x128xf32>, vector<8x128xf32> -> vector<8x384xf32>
    %7 = arith.truncf %6 : vector<8x384xf32> to vector<8x384xbf16>
    %c0_7 = arith.constant 0 : index
    %c0_8 = arith.constant 0 : index
    %8 = vector.load %arg4[%c0_7, %c0_8] : memref<384x768xbf16, #tpu.memory_space<vmem>>, vector<384x768xbf16>
    %cst_9 = arith.constant dense<0.000000e+00> : vector<8x768xf32>
    %9 = tpu.matmul %7, %8, %cst_9 {dimension_numbers = #tpu.dot_dimension_numbers<[1], [0], [0], [1], [0, 0, 1, 1], [], []>} : vector<8x384xbf16>, vector<384x768xbf16>, vector<8x768xf32> -> vector<8x768xf32>
    %c0_10 = arith.constant 0 : index
    %c0_11 = arith.constant 0 : index
    %10 = vector.load %arg5[%c0_10, %c0_11] : memref<1x768xf32, #tpu.memory_space<vmem>>, vector<1x768xf32>
    %11 = vector.broadcast %10 : vector<1x768xf32> to vector<8x768xf32>
    %12 = arith.addf %9, %11 : vector<8x768xf32>
    %13 = vector.extract_strided_slice %12 {offsets = [0, 0], sizes = [8, 512], strides = [1, 1]} : vector<8x768xf32> to vector<8x512xf32>
    %14 = arith.negf %13 : vector<8x512xf32>
    %15 = math.exp %14 : vector<8x512xf32>
    %cst_12 = arith.constant 1.000000e+00 : f32
    %16 = vector.broadcast %cst_12 : f32 to vector<8x512xf32>
    %17 = arith.addf %16, %15 : vector<8x512xf32>
    %18 = arith.divf %16, %17 : vector<8x512xf32>
    %19 = vector.extract_strided_slice %18 {offsets = [0, 0], sizes = [8, 128], strides = [1, 1]} : vector<8x512xf32> to vector<8x128xf32>
    %20 = vector.extract_strided_slice %18 {offsets = [0, 128], sizes = [8, 128], strides = [1, 1]} : vector<8x512xf32> to vector<8x128xf32>
    %21 = vector.extract_strided_slice %18 {offsets = [0, 256], sizes = [8, 128], strides = [1, 1]} : vector<8x512xf32> to vector<8x128xf32>
    %22 = vector.extract_strided_slice %18 {offsets = [0, 384], sizes = [8, 128], strides = [1, 1]} : vector<8x512xf32> to vector<8x128xf32>
    %23 = vector.extract_strided_slice %12 {offsets = [0, 512], sizes = [8, 128], strides = [1, 1]} : vector<8x768xf32> to vector<8x128xf32>
    %24 = vector.extract_strided_slice %12 {offsets = [0, 640], sizes = [8, 128], strides = [1, 1]} : vector<8x768xf32> to vector<8x128xf32>
    %25 = arith.maximumf %23, %24 : vector<8x128xf32>
    %c0_13 = arith.constant 0 : index
    %c0_14 = arith.constant 0 : index
    %26 = vector.load %arg3[%c0_13, %c0_14] : memref<8x128xf32, #tpu.memory_space<vmem>>, vector<8x128xf32>
    %27 = arith.mulf %20, %26 : vector<8x128xf32>
    %28 = arith.mulf %19, %25 : vector<8x128xf32>
    %29 = arith.addf %27, %28 : vector<8x128xf32>
    %30 = math.tanh %29 : vector<8x128xf32>
    %31 = arith.mulf %21, %30 : vector<8x128xf32>
    %32 = arith.mulf %22, %30 : vector<8x128xf32>
    %33 = tpu.concatenate %31, %30, %32 in 1 : vector<8x128xf32>, vector<8x128xf32>, vector<8x128xf32> -> vector<8x384xf32>
    %c0_15 = arith.constant 0 : index
    %c0_16 = arith.constant 0 : index
    %34 = vector.load %arg6[%c0_15, %c0_16] : memref<8x384xf32, #tpu.memory_space<vmem>>, vector<8x384xf32>
    tpu.vector_store %arg6[%c0_15, %c0_16], %33 {strides = array<i32>} : memref<8x384xf32, #tpu.memory_space<vmem>>, vector<8x384xf32>,
    return
  }
}

</mosaic_0001>

<llo_original>
// kernel: tpu_custom_call.1
$region0: #{tpu_custom_call.1}
  #allocation0 [shape = 'u32[]', space=smem, size = 0x4, offset = 0x4, fixed_abs, tag = 'smem constant byte address 0x4 - core index']
  #allocation1 [shape = 'u32[144,128]{1,0:T(1,128)}', space=vmem, size = 0x12000, scoped, tag = 'internal scratch']
  %s0 = inlined_call_operand.hbm [shape: f32[4,8,128], index: 0, kind: input, shape index: {}]
  %s1 = inlined_call_operand.hbm [shape: f32[8,128], index: 1, kind: input, shape index: {}]
  %s2 = inlined_call_operand.hbm [shape: f32[8,128], index: 2, kind: input, shape index: {}]
  %s3 = inlined_call_operand.hbm [shape: f32[8,128], index: 3, kind: input, shape index: {}]
  %s4 = inlined_call_operand.hbm [shape: bf16[384,768], index: 4, kind: input, shape index: {}]
  %s5 = inlined_call_operand.vmem [shape: f32[1,768], index: 5, kind: input, shape index: {}]
  %s6 = inlined_call_operand.hbm [shape: f32[8,384], index: 6, kind: output, shape index: {}]
  %s7 = sld [smem:[#allocation0]]
  $region54: #{tpu_custom_call.1} parent=0
    _
  %s9 = ssub.s32 1, %s7
  %s10 = scalar_select 0, %s9, %s7
  $region1: #{tpu_custom_call.1} parent=0
    #allocation2 [shape = 'u8[16384]{0}', space=vmem, size = 0x4000, scoped, tag = 'input window, operand 0, single buffered']
    #allocation3 [shape = 's32[1]{0}', space=sflag, size = 0x4, scoped, tag = 'scoped memory for tpu_custom_call.1']
    #allocation4 [shape = 's32[1]{0}', space=sflag, size = 0x4, scoped, tag = 'scoped memory for tpu_custom_call.1']
    #allocation5 [shape = 'u8[4096]{0}', space=vmem, size = 0x1000, scoped, tag = 'input window, operand 1, single buffered']
    #allocation6 [shape = 's32[1]{0}', space=sflag, size = 0x4, scoped, tag = 'scoped memory for tpu_custom_call.1']
    #allocation7 [shape = 'u8[4096]{0}', space=vmem, size = 0x1000, scoped, tag = 'input window, operand 2, single buffered']
    #allocation8 [shape = 'u8[4096]{0}', space=vmem, size = 0x1000, scoped, tag = 'input window, operand 3, single buffered']
    #allocation9 [shape = 's32[1]{0}', space=sflag, size = 0x4, scoped, tag = 'scoped memory for tpu_custom_call.1']
    #allocation10 [shape = 'u8[589824]{0}', space=vmem, size = 0x90000, scoped, tag = 'input window, operand 4, single buffered']
    #allocation11 [shape = 'u8[12288]{0}', space=vmem, size = 0x3000, scoped, tag = 'output window, operand 0, single buffered']
    %11 = vsyncpa [#allocation3], 0
    %12 = vsyncpa [#allocation6], 0
    %13 = vsyncpa [#allocation9], 0
    %14 = vsyncpa [#allocation4], 0
    // Predicated region
    $region2: #{tpu_custom_call.1} parent=1 // pred_check
      _
    $region3: #{tpu_custom_call.1} parent=1 // pred_check_branch
      %16 = sbr.rel (0) target = $region5
    $region4: #{tpu_custom_call.1} parent=1 // pred_region
      %s18 = ssub.s32 512, 512
      %19 = vsyncadd [#allocation3], %s18
      %s20 = sshll.u32 [#allocation2], 4
      %s21 = int_to_ptr.vmem [resolvable:$true] %s20
      %26 = dma.hbm_to_vmem [thread:$0]  %s0, 512, %s21, [#allocation3], 128, 128, 8
    $region5: #{tpu_custom_call.1} parent=1 // pred_fallthru
      _
    // Predicated region
    $region6: #{tpu_custom_call.1} parent=1 // pred_check
      _
    $region7: #{tpu_custom_call.1} parent=1 // pred_check_branch
      %28 = sbr.rel (0) target = $region9
    $region8: #{tpu_custom_call.1} parent=1 // pred_region
      %s30 = ssub.s32 128, 128
      %31 = vsyncadd [#allocation6], %s30
      %s33 = sshll.u32 [#allocation5], 4
      %s34 = int_to_ptr.vmem [resolvable:$true] %s33
      %36 = dma.hbm_to_vmem [thread:$0]  %s1, 128, %s34, [#allocation6]
    $region9: #{tpu_custom_call.1} parent=1 // pred_fallthru
      _
    // Predicated region
    $region10: #{tpu_custom_call.1} parent=1 // pred_check
      _
    $region11: #{tpu_custom_call.1} parent=1 // pred_check_branch
      %38 = sbr.rel (0) target = $region13
    $region12: #{tpu_custom_call.1} parent=1 // pred_region
      %s40 = ssub.s32 128, 128
      %41 = vsyncadd [#allocation6], %s40
      %s43 = sshll.u32 [#allocation7], 4
      %s44 = int_to_ptr.vmem [resolvable:$true] %s43
      %46 = dma.hbm_to_vmem [thread:$0]  %s2, 128, %s44, [#allocation6]
    $region13: #{tpu_custom_call.1} parent=1 // pred_fallthru
      _
    // Predicated region
    $region14: #{tpu_custom_call.1} parent=1 // pred_check
      _
    $region15: #{tpu_custom_call.1} parent=1 // pred_check_branch
      %48 = sbr.rel (0) target = $region17
    $region16: #{tpu_custom_call.1} parent=1 // pred_region
      %s50 = ssub.s32 128, 128
      %51 = vsyncadd [#allocation9], %s50
      %s53 = sshll.u32 [#allocation8], 4
      %s54 = int_to_ptr.vmem [resolvable:$true] %s53
      %56 = dma.hbm_to_vmem [thread:$0]  %s3, 128, %s54, [#allocation9]
    $region17: #{tpu_custom_call.1} parent=1 // pred_fallthru
      _
    // Predicated region
    $region18: #{tpu_custom_call.1} parent=1 // pred_check
      _
    $region19: #{tpu_custom_call.1} parent=1 // pred_check_branch
      %58 = sbr.rel (0) target = $region21
    $region20: #{tpu_custom_call.1} parent=1 // pred_region
      %s60 = ssub.s32 18432, 18432
      %61 = vsyncadd [#allocation9], %s60
      %s62 = sshll.u32 [#allocation10], 4
      %s63 = int_to_ptr.vmem [resolvable:$true] %s62
      %68 = dma.hbm_to_vmem [thread:$0]  %s4, 18432, %s63, [#allocation9], 384, 384, 24
    $region21: #{tpu_custom_call.1} parent=1 // pred_fallthru
      _
    // Predicated region
    $region22: #{tpu_custom_call.1} parent=1 // pred_check
      _
    $region23: #{tpu_custom_call.1} parent=1 // pred_check_branch
      %70 = sbr.rel (0) target = $region25
    $region24: #{tpu_custom_call.1} parent=1 // pred_region
      _
    $region25: #{tpu_custom_call.1} parent=1 // pred_fallthru
      _
    // Predicated region
    $region26: #{tpu_custom_call.1} parent=1 // pred_check
      _
    $region27: #{tpu_custom_call.1} parent=1 // pred_check_branch
      %72 = sbr.rel (0) target = $region29
    $region28: #{tpu_custom_call.1} parent=1 // pred_region
      %73 = dma.done [#allocation3], 512
    $region29: #{tpu_custom_call.1} parent=1 // pred_fallthru
      _
    // Predicated region
    $region30: #{tpu_custom_call.1} parent=1 // pred_check
      _
    $region31: #{tpu_custom_call.1} parent=1 // pred_check_branch
      %75 = sbr.rel (0) target = $region33
    $region32: #{tpu_custom_call.1} parent=1 // pred_region
      %76 = dma.done [#allocation6], 128
    $region33: #{tpu_custom_call.1} parent=1 // pred_fallthru
      _
    // Predicated region
    $region34: #{tpu_custom_call.1} parent=1 // pred_check
      _
    $region35: #{tpu_custom_call.1} parent=1 // pred_check_branch
      %78 = sbr.rel (0) target = $region37
    $region36: #{tpu_custom_call.1} parent=1 // pred_region
      %79 = dma.done [#allocation6], 128
    $region37: #{tpu_custom_call.1} parent=1 // pred_fallthru
      _
    // Predicated region
    $region38: #{tpu_custom_call.1} parent=1 // pred_check
      _
    $region39: #{tpu_custom_call.1} parent=1 // pred_check_branch
      %81 = sbr.rel (0) target = $region41
    $region40: #{tpu_custom_call.1} parent=1 // pred_region
      %82 = dma.done [#allocation9], 128
    $region41: #{tpu_custom_call.1} parent=1 // pred_fallthru
      _
    // Predicated region
    $region42: #{tpu_custom_call.1} parent=1 // pred_check
      _
    $region43: #{tpu_custom_call.1} parent=1 // pred_check_branch
      %84 = sbr.rel (0) target = $region45
    $region44: #{tpu_custom_call.1} parent=1 // pred_region
      %85 = dma.done [#allocation9], 18432
    $region45: #{tpu_custom_call.1} parent=1 // pred_fallthru
      _
    %v87 = vld [vmem:[#allocation2] sm:$0xff]
    %v88 = vld [vmem:[#allocation2 + $0x8] sm:$0xff]
    %v89 = vld [vmem:[#allocation2 + $0x10] sm:$0xff]
    %v90 = vld [vmem:[#allocation2 + $0x18] sm:$0xff]
    %v91 = vadd.f32 %v87, %v88
    %v92 = vadd.f32 %v91, %v89
    %v93 = vadd.f32 %v92, %v90
    %v94 = vrcp.pop 4.0
    %v95 = vmul.f32 %v93, %v94
    %v96 = vld [vmem:[#allocation5] sm:$0xff]
    %v97 = vld [vmem:[#allocation7] sm:$0xff]
    %v98 = vpack.c.bf16 %v96, %v96
    %v99 = vpack.c.bf16 %v97, %v97
    %v100 = vpack.c.bf16 %v95, %v95
    %v101 = vld [vmem:[#allocation10] sm:$0xff]
    %v102 = vld [vmem:[#allocation10 + $0x8] sm:$0xff]
    %v103 = vld [vmem:[#allocation10 + $0x10] sm:$0xff]
    %v104 = vld [vmem:[#allocation10 + $0x18] sm:$0xff]
    %v105 = vld [vmem:[#allocation10 + $0x20] sm:$0xff]
    %v106 = vld [vmem:[#allocation10 + $0x28] sm:$0xff]
    %v107 = vld [vmem:[#allocation10 + $0x30] sm:$0xff]
    %v108 = vld [vmem:[#allocation10 + $0x38] sm:$0xff]
    %v109 = vld [vmem:[#allocation10 + $0x40] sm:$0xff]
    %v110 = vld [vmem:[#allocation10 + $0x48] sm:$0xff]
    %v111 = vld [vmem:[#allocation10 + $0x50] sm:$0xff]
    %v112 = vld [vmem:[#allocation10 + $0x58] sm:$0xff]
    %v113 = vld [vmem:[#allocation10 + $0x60] sm:$0xff]
    %v114 = vld [vmem:[#allocation10 + $0x68] sm:$0xff]
    %v115 = vld [vmem:[#allocation10 + $0x70] sm:$0xff]
    %v116 = vld [vmem:[#allocation10 + $0x78] sm:$0xff]
    %v117 = vld [vmem:[#allocation10 + $0x80] sm:$0xff]
    %v118 = vld [vmem:[#allocation10 + $0x88] sm:$0xff]
    %v119 = vld [vmem:[#allocation10 + $0x90] sm:$0xff]
    %v120 = vld [vmem:[#allocation10 + $0x98] sm:$0xff]
    %v121 = vld [vmem:[#allocation10 + $0xa0] sm:$0xff]
    %v122 = vld [vmem:[#allocation10 + $0xa8] sm:$0xff]
    %v123 = vld [vmem:[#allocation10 + $0xb0] sm:$0xff]
    %v124 = vld [vmem:[#allocation10 + $0xb8] sm:$0xff]
    %v125 = vld [vmem:[#allocation10 + $0xc0] sm:$0xff]
    %v126 = vld [vmem:[#allocation10 + $0xc8] sm:$0xff]
    %v127 = vld [vmem:[#allocation10 + $0xd0] sm:$0xff]
    %v128 = vld [vmem:[#allocation10 + $0xd8] sm:$0xff]
    %v129 = vld [vmem:[#allocation10 + $0xe0] sm:$0xff]
    %v130 = vld [vmem:[#allocation10 + $0xe8] sm:$0xff]
    %v131 = vld [vmem:[#allocation10 + $0xf0] sm:$0xff]
    %v132 = vld [vmem:[#allocation10 + $0xf8] sm:$0xff]
    %v133 = vld [vmem:[#allocation10 + $0x100] sm:$0xff]
    %v134 = vld [vmem:[#allocation10 + $0x108] sm:$0xff]
    %v135 = vld [vmem:[#allocation10 + $0x110] sm:$0xff]
    %v136 = vld [vmem:[#allocation10 + $0x118] sm:$0xff]
    %v137 = vld [vmem:[#allocation10 + $0x120] sm:$0xff]
    %v138 = vld [vmem:[#allocation10 + $0x128] sm:$0xff]
    %v139 = vld [vmem:[#allocation10 + $0x130] sm:$0xff]
    %v140 = vld [vmem:[#allocation10 + $0x138] sm:$0xff]
    %v141 = vld [vmem:[#allocation10 + $0x140] sm:$0xff]
    %v142 = vld [vmem:[#allocation10 + $0x148] sm:$0xff]
    %v143 = vld [vmem:[#allocation10 + $0x150] sm:$0xff]
    %v144 = vld [vmem:[#allocation10 + $0x158] sm:$0xff]
    %v145 = vld [vmem:[#allocation10 + $0x160] sm:$0xff]
    %v146 = vld [vmem:[#allocation10 + $0x168] sm:$0xff]
    %v147 = vld [vmem:[#allocation10 + $0x170] sm:$0xff]
    %v148 = vld [vmem:[#allocation10 + $0x178] sm:$0xff]
    %v149 = vld [vmem:[#allocation10 + $0x180] sm:$0xff]
    %v150 = vld [vmem:[#allocation10 + $0x188] sm:$0xff]
    %v151 = vld [vmem:[#allocation10 + $0x190] sm:$0xff]
    %v152 = vld [vmem:[#allocation10 + $0x198] sm:$0xff]
    %v153 = vld [vmem:[#allocation10 + $0x1a0] sm:$0xff]
    %v154 = vld [vmem:[#allocation10 + $0x1a8] sm:$0xff]
    %v155 = vld [vmem:[#allocation10 + $0x1b0] sm:$0xff]
    %v156 = vld [vmem:[#allocation10 + $0x1b8] sm:$0xff]
    %v157 = vld [vmem:[#allocation10 + $0x1c0] sm:$0xff]
    %v158 = vld [vmem:[#allocation10 + $0x1c8] sm:$0xff]
    %v159 = vld [vmem:[#allocation10 + $0x1d0] sm:$0xff]
    %v160 = vld [vmem:[#allocation10 + $0x1d8] sm:$0xff]
    %v161 = vld [vmem:[#allocation10 + $0x1e0] sm:$0xff]
    %v162 = vld [vmem:[#allocation10 + $0x1e8] sm:$0xff]
    %v163 = vld [vmem:[#allocation10 + $0x1f0] sm:$0xff]
    %v164 = vld [vmem:[#allocation10 + $0x1f8] sm:$0xff]
    %v165 = vld [vmem:[#allocation10 + $0x200] sm:$0xff]
    %v166 = vld [vmem:[#allocation10 + $0x208] sm:$0xff]
    %v167 = vld [vmem:[#allocation10 + $0x210] sm:$0xff]
    %v168 = vld [vmem:[#allocation10 + $0x218] sm:$0xff]
    %v169 = vld [vmem:[#allocation10 + $0x220] sm:$0xff]
    %v170 = vld [vmem:[#allocation10 + $0x228] sm:$0xff]
    %v171 = vld [vmem:[#allocation10 + $0x230] sm:$0xff]
    %v172 = vld [vmem:[#allocation10 + $0x238] sm:$0xff]
    %v173 = vld [vmem:[#allocation10 + $0x240] sm:$0xff]
    %v174 = vld [vmem:[#allocation10 + $0x248] sm:$0xff]
    %v175 = vld [vmem:[#allocation10 + $0x250] sm:$0xff]
    %v176 = vld [vmem:[#allocation10 + $0x258] sm:$0xff]
    %v177 = vld [vmem:[#allocation10 + $0x260] sm:$0xff]
    %v178 = vld [vmem:[#allocation10 + $0x268] sm:$0xff]
    %v179 = vld [vmem:[#allocation10 + $0x270] sm:$0xff]
    %v180 = vld [vmem:[#allocation10 + $0x278] sm:$0xff]
    %v181 = vld [vmem:[#allocation10 + $0x280] sm:$0xff]
    %v182 = vld [vmem:[#allocation10 + $0x288] sm:$0xff]
    %v183 = vld [vmem:[#allocation10 + $0x290] sm:$0xff]
    %v184 = vld [vmem:[#allocation10 + $0x298] sm:$0xff]
    %v185 = vld [vmem:[#allocation10 + $0x2a0] sm:$0xff]
    %v186 = vld [vmem:[#allocation10 + $0x2a8] sm:$0xff]
    %v187 = vld [vmem:[#allocation10 + $0x2b0] sm:$0xff]
    %v188 = vld [vmem:[#allocation10 + $0x2b8] sm:$0xff]
    %v189 = vld [vmem:[#allocation10 + $0x2c0] sm:$0xff]
    %v190 = vld [vmem:[#allocation10 + $0x2c8] sm:$0xff]
    %v191 = vld [vmem:[#allocation10 + $0x2d0] sm:$0xff]
    %v192 = vld [vmem:[#allocation10 + $0x2d8] sm:$0xff]
    %v193 = vld [vmem:[#allocation10 + $0x2e0] sm:$0xff]
    %v194 = vld [vmem:[#allocation10 + $0x2e8] sm:$0xff]
    %v195 = vld [vmem:[#allocation10 + $0x2f0] sm:$0xff]
    %v196 = vld [vmem:[#allocation10 + $0x2f8] sm:$0xff]
    %v197 = vld [vmem:[#allocation10 + $0x300] sm:$0xff]
    %v198 = vld [vmem:[#allocation10 + $0x308] sm:$0xff]
    %v199 = vld [vmem:[#allocation10 + $0x310] sm:$0xff]
    %v200 = vld [vmem:[#allocation10 + $0x318] sm:$0xff]
    %v201 = vld [vmem:[#allocation10 + $0x320] sm:$0xff]
    %v202 = vld [vmem:[#allocation10 + $0x328] sm:$0xff]
    %v203 = vld [vmem:[#allocation10 + $0x330] sm:$0xff]
    %v204 = vld [vmem:[#allocation10 + $0x338] sm:$0xff]
    %v205 = vld [vmem:[#allocation10 + $0x340] sm:$0xff]
    %v206 = vld [vmem:[#allocation10 + $0x348] sm:$0xff]
    %v207 = vld [vmem:[#allocation10 + $0x350] sm:$0xff]
    %v208 = vld [vmem:[#allocation10 + $0x358] sm:$0xff]
    %v209 = vld [vmem:[#allocation10 + $0x360] sm:$0xff]
    %v210 = vld [vmem:[#allocation10 + $0x368] sm:$0xff]
    %v211 = vld [vmem:[#allocation10 + $0x370] sm:$0xff]
    %v212 = vld [vmem:[#allocation10 + $0x378] sm:$0xff]
    %v213 = vld [vmem:[#allocation10 + $0x380] sm:$0xff]
    %v214 = vld [vmem:[#allocation10 + $0x388] sm:$0xff]
    %v215 = vld [vmem:[#allocation10 + $0x390] sm:$0xff]
    %v216 = vld [vmem:[#allocation10 + $0x398] sm:$0xff]
    %v217 = vld [vmem:[#allocation10 + $0x3a0] sm:$0xff]
    %v218 = vld [vmem:[#allocation10 + $0x3a8] sm:$0xff]
    %v219 = vld [vmem:[#allocation10 + $0x3b0] sm:$0xff]
    %v220 = vld [vmem:[#allocation10 + $0x3b8] sm:$0xff]
    %v221 = vld [vmem:[#allocation10 + $0x3c0] sm:$0xff]
    %v222 = vld [vmem:[#allocation10 + $0x3c8] sm:$0xff]
    %v223 = vld [vmem:[#allocation10 + $0x3d0] sm:$0xff]
    %v224 = vld [vmem:[#allocation10 + $0x3d8] sm:$0xff]
    %v225 = vld [vmem:[#allocation10 + $0x3e0] sm:$0xff]
    %v226 = vld [vmem:[#allocation10 + $0x3e8] sm:$0xff]
    %v227 = vld [vmem:[#allocation10 + $0x3f0] sm:$0xff]
    %v228 = vld [vmem:[#allocation10 + $0x3f8] sm:$0xff]
    %v229 = vld [vmem:[#allocation10 + $0x400] sm:$0xff]
    %v230 = vld [vmem:[#allocation10 + $0x408] sm:$0xff]
    %v231 = vld [vmem:[#allocation10 + $0x410] sm:$0xff]
    %v232 = vld [vmem:[#allocation10 + $0x418] sm:$0xff]
    %v233 = vld [vmem:[#allocation10 + $0x420] sm:$0xff]
    %v234 = vld [vmem:[#allocation10 + $0x428] sm:$0xff]
    %v235 = vld [vmem:[#allocation10 + $0x430] sm:$0xff]
    %v236 = vld [vmem:[#allocation10 + $0x438] sm:$0xff]
    %v237 = vld [vmem:[#allocation10 + $0x440] sm:$0xff]
    %v238 = vld [vmem:[#allocation10 + $0x448] sm:$0xff]
    %v239 = vld [vmem:[#allocation10 + $0x450] sm:$0xff]
    %v240 = vld [vmem:[#allocation10 + $0x458] sm:$0xff]
    %v241 = vld [vmem:[#allocation10 + $0x460] sm:$0xff]
    %v242 = vld [vmem:[#allocation10 + $0x468] sm:$0xff]
    %v243 = vld [vmem:[#allocation10 + $0x470] sm:$0xff]
    %v244 = vld [vmem:[#allocation10 + $0x478] sm:$0xff]
    %v245 = vld [vmem:[%s5] sm:$0x3f]
    %v247 = vlaneseq
    %v248 = vshrl.u32 %v247, 7
    %v249 = vsub.s32 0, %v248
    %v250 = vrot.slane %v245, %v249
    %v251 = vlaneseq
    %v252 = vshrl.u32 %v251, 7
    %v253 = vsub.s32 1, %v252
    %v254 = vrot.slane %v245, %v253
    %v255 = vlaneseq
    %v256 = vshrl.u32 %v255, 7
    %v257 = vsub.s32 2, %v256
    %v258 = vrot.slane %v245, %v257
    %v259 = vlaneseq
    %v260 = vshrl.u32 %v259, 7
    %v261 = vsub.s32 3, %v260
    %v262 = vrot.slane %v245, %v261
    %v263 = vlaneseq
    %v264 = vshrl.u32 %v263, 7
    %v265 = vsub.s32 4, %v264
    %v266 = vrot.slane %v245, %v265
    %v267 = vlaneseq
    %v268 = vshrl.u32 %v267, 7
    %v269 = vsub.s32 5, %v268
    %v270 = vrot.slane %v245, %v269
    %v421 = vunpack.c.l.b16 %v101
    %v422 = vunpack.c.h.b16 %v101
    %v423 = vunpack.c.l.b16 %v102
    %v424 = vunpack.c.h.b16 %v102
    %v425 = vunpack.c.l.b16 %v103
    %v426 = vunpack.c.h.b16 %v103
    %v427 = vunpack.c.l.b16 %v104
    %v428 = vunpack.c.h.b16 %v104
    %v429 = vunpack.c.l.b16 %v105
    %v430 = vunpack.c.h.b16 %v105
    %v431 = vunpack.c.l.b16 %v106
    %v432 = vunpack.c.h.b16 %v106
    %v433 = vunpack.c.l.b16 %v107
    %v434 = vunpack.c.h.b16 %v107
    %v435 = vunpack.c.l.b16 %v108
    %v436 = vunpack.c.h.b16 %v108
    %v437 = vunpack.c.l.b16 %v109
    %v438 = vunpack.c.h.b16 %v109
    %v439 = vunpack.c.l.b16 %v110
    %v440 = vunpack.c.h.b16 %v110
    %v441 = vunpack.c.l.b16 %v111
    %v442 = vunpack.c.h.b16 %v111
    %v443 = vunpack.c.l.b16 %v112
    %v444 = vunpack.c.h.b16 %v112
    %v445 = vunpack.c.l.b16 %v113
    %v446 = vunpack.c.h.b16 %v113
    %v447 = vunpack.c.l.b16 %v114
    %v448 = vunpack.c.h.b16 %v114
    %v449 = vunpack.c.l.b16 %v115
    %v450 = vunpack.c.h.b16 %v115
    %v451 = vunpack.c.l.b16 %v116
    %v452 = vunpack.c.h.b16 %v116
    %v453 = vunpack.c.l.b16 %v117
    %v454 = vunpack.c.h.b16 %v117
    %v455 = vunpack.c.l.b16 %v118
    %v456 = vunpack.c.h.b16 %v118
    %v457 = vunpack.c.l.b16 %v119
    %v458 = vunpack.c.h.b16 %v119
    %v459 = vunpack.c.l.b16 %v120
    %v460 = vunpack.c.h.b16 %v120
    %v461 = vunpack.c.l.b16 %v121
    %v462 = vunpack.c.h.b16 %v121
    %v463 = vunpack.c.l.b16 %v122
    %v464 = vunpack.c.h.b16 %v122
    %v465 = vunpack.c.l.b16 %v123
    %v466 = vunpack.c.h.b16 %v123
    %v467 = vunpack.c.l.b16 %v124
    %v468 = vunpack.c.h.b16 %v124
    %v469 = vunpack.c.l.b16 %v125
    %v470 = vunpack.c.h.b16 %v125
    %v471 = vunpack.c.l.b16 %v126
    %v472 = vunpack.c.h.b16 %v126
    %v473 = vunpack.c.l.b16 %v127
    %v474 = vunpack.c.h.b16 %v127
    %v475 = vunpack.c.l.b16 %v128
    %v476 = vunpack.c.h.b16 %v128
    %v477 = vunpack.c.l.b16 %v129
    %v478 = vunpack.c.h.b16 %v129
    %v479 = vunpack.c.l.b16 %v130
    %v480 = vunpack.c.h.b16 %v130
    %v481 = vunpack.c.l.b16 %v131
    %v482 = vunpack.c.h.b16 %v131
    %v483 = vunpack.c.l.b16 %v132
    %v484 = vunpack.c.h.b16 %v132
    %v485 = vunpack.c.l.b16 %v133
    %v486 = vunpack.c.h.b16 %v133
    %v487 = vunpack.c.l.b16 %v134
    %v488 = vunpack.c.h.b16 %v134
    %v489 = vunpack.c.l.b16 %v135
    %v490 = vunpack.c.h.b16 %v135
    %v491 = vunpack.c.l.b16 %v136
    %v492 = vunpack.c.h.b16 %v136
    %v493 = vunpack.c.l.b16 %v137
    %v494 = vunpack.c.h.b16 %v137
    %v495 = vunpack.c.l.b16 %v138
    %v496 = vunpack.c.h.b16 %v138
    %v497 = vunpack.c.l.b16 %v139
    %v498 = vunpack.c.h.b16 %v139
    %v499 = vunpack.c.l.b16 %v140
    %v500 = vunpack.c.h.b16 %v140
    %v501 = vunpack.c.l.b16 %v141
    %v502 = vunpack.c.h.b16 %v141
    %v503 = vunpack.c.l.b16 %v142
    %v504 = vunpack.c.h.b16 %v142
    %v505 = vunpack.c.l.b16 %v143
    %v506 = vunpack.c.h.b16 %v143
    %v507 = vunpack.c.l.b16 %v144
    %v508 = vunpack.c.h.b16 %v144
    %v509 = vunpack.c.l.b16 %v145
    %v510 = vunpack.c.h.b16 %v145
    %v511 = vunpack.c.l.b16 %v146
    %v512 = vunpack.c.h.b16 %v146
    %v513 = vunpack.c.l.b16 %v147
    %v514 = vunpack.c.h.b16 %v147
    %v515 = vunpack.c.l.b16 %v148
    %v516 = vunpack.c.h.b16 %v148
    %v517 = vunpack.c.l.b16 %v149
    %v518 = vunpack.c.h.b16 %v149
    %v519 = vunpack.c.l.b16 %v150
    %v520 = vunpack.c.h.b16 %v150
    %v521 = vunpack.c.l.b16 %v151
    %v522 = vunpack.c.h.b16 %v151
    %v523 = vunpack.c.l.b16 %v152
    %v524 = vunpack.c.h.b16 %v152
    %v525 = vunpack.c.l.b16 %v153
    %v526 = vunpack.c.h.b16 %v153
    %v527 = vunpack.c.l.b16 %v154
    %v528 = vunpack.c.h.b16 %v154
    %v529 = vunpack.c.l.b16 %v155
    %v530 = vunpack.c.h.b16 %v155
    %v531 = vunpack.c.l.b16 %v156
    %v532 = vunpack.c.h.b16 %v156
    %v533 = vunpack.c.l.b16 %v157
    %v534 = vunpack.c.h.b16 %v157
    %v535 = vunpack.c.l.b16 %v158
    %v536 = vunpack.c.h.b16 %v158
    %v537 = vunpack.c.l.b16 %v159
    %v538 = vunpack.c.h.b16 %v159
    %v539 = vunpack.c.l.b16 %v160
    %v540 = vunpack.c.h.b16 %v160
    %v541 = vunpack.c.l.b16 %v161
    %v542 = vunpack.c.h.b16 %v161
    %v543 = vunpack.c.l.b16 %v162
    %v544 = vunpack.c.h.b16 %v162
    %v545 = vunpack.c.l.b16 %v163
    %v546 = vunpack.c.h.b16 %v163
    %v547 = vunpack.c.l.b16 %v164
    %v548 = vunpack.c.h.b16 %v164
    %v549 = vunpack.c.l.b16 %v165
    %v550 = vunpack.c.h.b16 %v165
    %v551 = vunpack.c.l.b16 %v166
    %v552 = vunpack.c.h.b16 %v166
    %v553 = vunpack.c.l.b16 %v167
    %v554 = vunpack.c.h.b16 %v167
    %v555 = vunpack.c.l.b16 %v168
    %v556 = vunpack.c.h.b16 %v168
    %v557 = vunpack.c.l.b16 %v169
    %v558 = vunpack.c.h.b16 %v169
    %v559 = vunpack.c.l.b16 %v170
    %v560 = vunpack.c.h.b16 %v170
    %v561 = vunpack.c.l.b16 %v171
    %v562 = vunpack.c.h.b16 %v171
    %v563 = vunpack.c.l.b16 %v172
    %v564 = vunpack.c.h.b16 %v172
    %v565 = vunpack.c.l.b16 %v173
    %v566 = vunpack.c.h.b16 %v173
    %v567 = vunpack.c.l.b16 %v174
    %v568 = vunpack.c.h.b16 %v174
    %v569 = vunpack.c.l.b16 %v175
    %v570 = vunpack.c.h.b16 %v175
    %v571 = vunpack.c.l.b16 %v176
    %v572 = vunpack.c.h.b16 %v176
    %v573 = vunpack.c.l.b16 %v177
    %v574 = vunpack.c.h.b16 %v177
    %v575 = vunpack.c.l.b16 %v178
    %v576 = vunpack.c.h.b16 %v178
    %v577 = vunpack.c.l.b16 %v179
    %v578 = vunpack.c.h.b16 %v179
    %v579 = vunpack.c.l.b16 %v180
    %v580 = vunpack.c.h.b16 %v180
    %v581 = vunpack.c.l.b16 %v181
    %v582 = vunpack.c.h.b16 %v181
    %v583 = vunpack.c.l.b16 %v182
    %v584 = vunpack.c.h.b16 %v182
    %v585 = vunpack.c.l.b16 %v183
    %v586 = vunpack.c.h.b16 %v183
    %v587 = vunpack.c.l.b16 %v184
    %v588 = vunpack.c.h.b16 %v184
    %v589 = vunpack.c.l.b16 %v185
    %v590 = vunpack.c.h.b16 %v185
    %v591 = vunpack.c.l.b16 %v186
    %v592 = vunpack.c.h.b16 %v186
    %v593 = vunpack.c.l.b16 %v187
    %v594 = vunpack.c.h.b16 %v187
    %v595 = vunpack.c.l.b16 %v188
    %v596 = vunpack.c.h.b16 %v188
    %v597 = vunpack.c.l.b16 %v189
    %v598 = vunpack.c.h.b16 %v189
    %v599 = vunpack.c.l.b16 %v190
    %v600 = vunpack.c.h.b16 %v190
    %v601 = vunpack.c.l.b16 %v191
    %v602 = vunpack.c.h.b16 %v191
    %v603 = vunpack.c.l.b16 %v192
    %v604 = vunpack.c.h.b16 %v192
    %v605 = vunpack.c.l.b16 %v193
    %v606 = vunpack.c.h.b16 %v193
    %v607 = vunpack.c.l.b16 %v194
    %v608 = vunpack.c.h.b16 %v194
    %v609 = vunpack.c.l.b16 %v195
    %v610 = vunpack.c.h.b16 %v195
    %v611 = vunpack.c.l.b16 %v196
    %v612 = vunpack.c.h.b16 %v196
    %v613 = vunpack.c.l.b16 %v197
    %v614 = vunpack.c.h.b16 %v197
    %v615 = vunpack.c.l.b16 %v198
    %v616 = vunpack.c.h.b16 %v198
    %v617 = vunpack.c.l.b16 %v199
    %v618 = vunpack.c.h.b16 %v199
    %v619 = vunpack.c.l.b16 %v200
    %v620 = vunpack.c.h.b16 %v200
    %v621 = vunpack.c.l.b16 %v201
    %v622 = vunpack.c.h.b16 %v201
    %v623 = vunpack.c.l.b16 %v202
    %v624 = vunpack.c.h.b16 %v202
    %v625 = vunpack.c.l.b16 %v203
    %v626 = vunpack.c.h.b16 %v203
    %v627 = vunpack.c.l.b16 %v204
    %v628 = vunpack.c.h.b16 %v204
    %v629 = vunpack.c.l.b16 %v205
    %v630 = vunpack.c.h.b16 %v205
    %v631 = vunpack.c.l.b16 %v206
    %v632 = vunpack.c.h.b16 %v206
    %v633 = vunpack.c.l.b16 %v207
    %v634 = vunpack.c.h.b16 %v207
    %v635 = vunpack.c.l.b16 %v208
    %v636 = vunpack.c.h.b16 %v208
    %v637 = vunpack.c.l.b16 %v209
    %v638 = vunpack.c.h.b16 %v209
    %v639 = vunpack.c.l.b16 %v210
    %v640 = vunpack.c.h.b16 %v210
    %v641 = vunpack.c.l.b16 %v211
    %v642 = vunpack.c.h.b16 %v211
    %v643 = vunpack.c.l.b16 %v212
    %v644 = vunpack.c.h.b16 %v212
    %v645 = vunpack.c.l.b16 %v213
    %v646 = vunpack.c.h.b16 %v213
    %v647 = vunpack.c.l.b16 %v214
    %v648 = vunpack.c.h.b16 %v214
    %v649 = vunpack.c.l.b16 %v215
    %v650 = vunpack.c.h.b16 %v215
    %v651 = vunpack.c.l.b16 %v216
    %v652 = vunpack.c.h.b16 %v216
    %v653 = vunpack.c.l.b16 %v217
    %v654 = vunpack.c.h.b16 %v217
    %v655 = vunpack.c.l.b16 %v218
    %v656 = vunpack.c.h.b16 %v218
    %v657 = vunpack.c.l.b16 %v219
    %v658 = vunpack.c.h.b16 %v219
    %v659 = vunpack.c.l.b16 %v220
    %v660 = vunpack.c.h.b16 %v220
    %v661 = vunpack.c.l.b16 %v221
    %v662 = vunpack.c.h.b16 %v221
    %v663 = vunpack.c.l.b16 %v222
    %v664 = vunpack.c.h.b16 %v222
    %v665 = vunpack.c.l.b16 %v223
    %v666 = vunpack.c.h.b16 %v223
    %v667 = vunpack.c.l.b16 %v224
    %v668 = vunpack.c.h.b16 %v224
    %v669 = vunpack.c.l.b16 %v225
    %v670 = vunpack.c.h.b16 %v225
    %v671 = vunpack.c.l.b16 %v226
    %v672 = vunpack.c.h.b16 %v226
    %v673 = vunpack.c.l.b16 %v227
    %v674 = vunpack.c.h.b16 %v227
    %v675 = vunpack.c.l.b16 %v228
    %v676 = vunpack.c.h.b16 %v228
    %v677 = vunpack.c.l.b16 %v229
    %v678 = vunpack.c.h.b16 %v229
    %v679 = vunpack.c.l.b16 %v230
    %v680 = vunpack.c.h.b16 %v230
    %v681 = vunpack.c.l.b16 %v231
    %v682 = vunpack.c.h.b16 %v231
    %v683 = vunpack.c.l.b16 %v232
    %v684 = vunpack.c.h.b16 %v232
    %v685 = vunpack.c.l.b16 %v233
    %v686 = vunpack.c.h.b16 %v233
    %v687 = vunpack.c.l.b16 %v234
    %v688 = vunpack.c.h.b16 %v234
    %v689 = vunpack.c.l.b16 %v235
    %v690 = vunpack.c.h.b16 %v235
    %v691 = vunpack.c.l.b16 %v236
    %v692 = vunpack.c.h.b16 %v236
    %v693 = vunpack.c.l.b16 %v237
    %v694 = vunpack.c.h.b16 %v237
    %v695 = vunpack.c.l.b16 %v238
    %v696 = vunpack.c.h.b16 %v238
    %v697 = vunpack.c.l.b16 %v239
    %v698 = vunpack.c.h.b16 %v239
    %v699 = vunpack.c.l.b16 %v240
    %v700 = vunpack.c.h.b16 %v240
    %v701 = vunpack.c.l.b16 %v241
    %v702 = vunpack.c.h.b16 %v241
    %v703 = vunpack.c.l.b16 %v242
    %v704 = vunpack.c.h.b16 %v242
    %v705 = vunpack.c.l.b16 %v243
    %v706 = vunpack.c.h.b16 %v243
    %v707 = vunpack.c.l.b16 %v244
    %v708 = vunpack.c.h.b16 %v244
    %v709 = vpack.c.b16 %v427, %v421
    %v710 = vpack.c.b16 %v428, %v422
    %v711 = vpack.c.b16 %v429, %v423
    %v712 = vpack.c.b16 %v430, %v424
    %v713 = vpack.c.b16 %v431, %v425
    %v714 = vpack.c.b16 %v432, %v426
    %v715 = vpack.c.b16 %v439, %v433
    %v716 = vpack.c.b16 %v440, %v434
    %v717 = vpack.c.b16 %v441, %v435
    %v718 = vpack.c.b16 %v442, %v436
    %v719 = vpack.c.b16 %v443, %v437
    %v720 = vpack.c.b16 %v444, %v438
    %v721 = vpack.c.b16 %v451, %v445
    %v722 = vpack.c.b16 %v452, %v446
    %v723 = vpack.c.b16 %v453, %v447
    %v724 = vpack.c.b16 %v454, %v448
    %v725 = vpack.c.b16 %v455, %v449
    %v726 = vpack.c.b16 %v456, %v450
    %v727 = vpack.c.b16 %v463, %v457
    %v728 = vpack.c.b16 %v464, %v458
    %v729 = vpack.c.b16 %v465, %v459
    %v730 = vpack.c.b16 %v466, %v460
    %v731 = vpack.c.b16 %v467, %v461
    %v732 = vpack.c.b16 %v468, %v462
    %v733 = vpack.c.b16 %v475, %v469
    %v734 = vpack.c.b16 %v476, %v470
    %v735 = vpack.c.b16 %v477, %v471
    %v736 = vpack.c.b16 %v478, %v472
    %v737 = vpack.c.b16 %v479, %v473
    %v738 = vpack.c.b16 %v480, %v474
    %v739 = vpack.c.b16 %v487, %v481
    %v740 = vpack.c.b16 %v488, %v482
    %v741 = vpack.c.b16 %v489, %v483
    %v742 = vpack.c.b16 %v490, %v484
    %v743 = vpack.c.b16 %v491, %v485
    %v744 = vpack.c.b16 %v492, %v486
    %v745 = vpack.c.b16 %v499, %v493
    %v746 = vpack.c.b16 %v500, %v494
    %v747 = vpack.c.b16 %v501, %v495
    %v748 = vpack.c.b16 %v502, %v496
    %v749 = vpack.c.b16 %v503, %v497
    %v750 = vpack.c.b16 %v504, %v498
    %v751 = vpack.c.b16 %v511, %v505
    %v752 = vpack.c.b16 %v512, %v506
    %v753 = vpack.c.b16 %v513, %v507
    %v754 = vpack.c.b16 %v514, %v508
    %v755 = vpack.c.b16 %v515, %v509
    %v756 = vpack.c.b16 %v516, %v510
    %v757 = vpack.c.b16 %v523, %v517
    %v758 = vpack.c.b16 %v524, %v518
    %v759 = vpack.c.b16 %v525, %v519
    %v760 = vpack.c.b16 %v526, %v520
    %v761 = vpack.c.b16 %v527, %v521
    %v762 = vpack.c.b16 %v528, %v522
    %v763 = vpack.c.b16 %v535, %v529
    %v764 = vpack.c.b16 %v536, %v530
    %v765 = vpack.c.b16 %v537, %v531
    %v766 = vpack.c.b16 %v538, %v532
    %v767 = vpack.c.b16 %v539, %v533
    %v768 = vpack.c.b16 %v540, %v534
    %v769 = vpack.c.b16 %v547, %v541
    %v770 = vpack.c.b16 %v548, %v542
    %v771 = vpack.c.b16 %v549, %v543
    %v772 = vpack.c.b16 %v550, %v544
    %v773 = vpack.c.b16 %v551, %v545
    %v774 = vpack.c.b16 %v552, %v546
    %v775 = vpack.c.b16 %v559, %v553
    %v776 = vpack.c.b16 %v560, %v554
    %v777 = vpack.c.b16 %v561, %v555
    %v778 = vpack.c.b16 %v562, %v556
    %v779 = vpack.c.b16 %v563, %v557
    %v780 = vpack.c.b16 %v564, %v558
    %v781 = vpack.c.b16 %v571, %v565
    %v782 = vpack.c.b16 %v572, %v566
    %v783 = vpack.c.b16 %v573, %v567
    %v784 = vpack.c.b16 %v574, %v568
    %v785 = vpack.c.b16 %v575, %v569
    %v786 = vpack.c.b16 %v576, %v570
    %v787 = vpack.c.b16 %v583, %v577
    %v788 = vpack.c.b16 %v584, %v578
    %v789 = vpack.c.b16 %v585, %v579
    %v790 = vpack.c.b16 %v586, %v580
    %v791 = vpack.c.b16 %v587, %v581
    %v792 = vpack.c.b16 %v588, %v582
    %v793 = vpack.c.b16 %v595, %v589
    %v794 = vpack.c.b16 %v596, %v590
    %v795 = vpack.c.b16 %v597, %v591
    %v796 = vpack.c.b16 %v598, %v592
    %v797 = vpack.c.b16 %v599, %v593
    %v798 = vpack.c.b16 %v600, %v594
    %v799 = vpack.c.b16 %v607, %v601
    %v800 = vpack.c.b16 %v608, %v602
    %v801 = vpack.c.b16 %v609, %v603
    %v802 = vpack.c.b16 %v610, %v604
    %v803 = vpack.c.b16 %v611, %v605
    %v804 = vpack.c.b16 %v612, %v606
    %v805 = vpack.c.b16 %v619, %v613
    %v806 = vpack.c.b16 %v620, %v614
    %v807 = vpack.c.b16 %v621, %v615
    %v808 = vpack.c.b16 %v622, %v616
    %v809 = vpack.c.b16 %v623, %v617
    %v810 = vpack.c.b16 %v624, %v618
    %v811 = vpack.c.b16 %v631, %v625
    %v812 = vpack.c.b16 %v632, %v626
    %v813 = vpack.c.b16 %v633, %v627
    %v814 = vpack.c.b16 %v634, %v628
    %v815 = vpack.c.b16 %v635, %v629
    %v816 = vpack.c.b16 %v636, %v630
    %v817 = vpack.c.b16 %v643, %v637
    %v818 = vpack.c.b16 %v644, %v638
    %v819 = vpack.c.b16 %v645, %v639
    %v820 = vpack.c.b16 %v646, %v640
    %v821 = vpack.c.b16 %v647, %v641
    %v822 = vpack.c.b16 %v648, %v642
    %v823 = vpack.c.b16 %v655, %v649
    %v824 = vpack.c.b16 %v656, %v650
    %v825 = vpack.c.b16 %v657, %v651
    %v826 = vpack.c.b16 %v658, %v652
    %v827 = vpack.c.b16 %v659, %v653
    %v828 = vpack.c.b16 %v660, %v654
    %v829 = vpack.c.b16 %v667, %v661
    %v830 = vpack.c.b16 %v668, %v662
    %v831 = vpack.c.b16 %v669, %v663
    %v832 = vpack.c.b16 %v670, %v664
    %v833 = vpack.c.b16 %v671, %v665
    %v834 = vpack.c.b16 %v672, %v666
    %v835 = vpack.c.b16 %v679, %v673
    %v836 = vpack.c.b16 %v680, %v674
    %v837 = vpack.c.b16 %v681, %v675
    %v838 = vpack.c.b16 %v682, %v676
    %v839 = vpack.c.b16 %v683, %v677
    %v840 = vpack.c.b16 %v684, %v678
    %v841 = vpack.c.b16 %v691, %v685
    %v842 = vpack.c.b16 %v692, %v686
    %v843 = vpack.c.b16 %v693, %v687
    %v844 = vpack.c.b16 %v694, %v688
    %v845 = vpack.c.b16 %v695, %v689
    %v846 = vpack.c.b16 %v696, %v690
    %v847 = vpack.c.b16 %v703, %v697
    %v848 = vpack.c.b16 %v704, %v698
    %v849 = vpack.c.b16 %v705, %v699
    %v850 = vpack.c.b16 %v706, %v700
    %v851 = vpack.c.b16 %v707, %v701
    %v852 = vpack.c.b16 %v708, %v702
    %997 = vmatprep.subr.bf16.mxu0 %v752
    %998 = vmatpush1.bf16.msra.mxu0 %v751
    %999 = vmatprep.subr.bf16.mxu0 %v746
    %1000 = vmatpush1.bf16.msra.mxu0 %v745
    %1001 = vmatprep.subr.bf16.mxu0 %v740
    %1002 = vmatpush1.bf16.msra.mxu0 %v739
    %1003 = vmatprep.subr.bf16.mxu0 %v734
    %1004 = vmatpush1.bf16.msra.mxu0 %v733
    %1005 = vmatprep.subr.bf16.mxu0 %v728
    %1006 = vmatpush1.bf16.msra.mxu0 %v727
    %1007 = vmatprep.subr.bf16.mxu0 %v722
    %1008 = vmatpush1.bf16.msra.mxu0 %v721
    %1009 = vmatprep.subr.bf16.mxu0 %v716
    %1010 = vmatpush1.bf16.msra.mxu0 %v715
    %1011 = vmatprep.subr.bf16.mxu0 %v710
    %1012 = vmatpush1.bf16.msra.mxu0 %v709
    %1013 = vmatprep.subr.bf16.mxu0 %v800
    %1014 = vmatpush2.bf16.msra.mxu0 %v799
    %1015 = vmatprep.subr.bf16.mxu0 %v794
    %1016 = vmatpush2.bf16.msra.mxu0 %v793
    %1017 = vmatprep.subr.bf16.mxu0 %v788
    %1018 = vmatpush2.bf16.msra.mxu0 %v787
    %1019 = vmatprep.subr.bf16.mxu0 %v782
    %1020 = vmatpush2.bf16.msra.mxu0 %v781
    %1021 = vmatprep.subr.bf16.mxu0 %v776
    %1022 = vmatpush2.bf16.msra.mxu0 %v775
    %1023 = vmatprep.subr.bf16.mxu0 %v770
    %1024 = vmatpush2.bf16.msra.mxu0 %v769
    %1025 = vmatprep.subr.bf16.mxu0 %v764
    %1026 = vmatpush2.bf16.msra.mxu0 %v763
    %1027 = vmatprep.subr.bf16.mxu0 %v758
    %1028 = vmatpush2.bf16.msra.mxu0 %v757
    %1029 = vmatprep.mubr.bf16.mxu0 %v99
    %1030 = vmatmul.mubr.bf16.gmra.mxu0 %v98
    %v1031 = vpop.f32.mrf.mxu0
    %v1032 = vadd.f32 %v250, %v1031
    %v1033 = vpop.f32.mrf.mxu0
    %v1034 = vadd.f32 %v254, %v1033
    %v1035 = vpop.f32.mrf.mxu0
    %v1036 = vpop.f32.mrf.mxu0
    %1037 = vdwg.mxu0
    %1038 = vmatprep.subr.bf16.mxu0 %v848
    %1039 = vmatpush1.bf16.msra.mxu0 %v847
    %1040 = vmatprep.subr.bf16.mxu0 %v842
    %1041 = vmatpush1.bf16.msra.mxu0 %v841
    %1042 = vmatprep.subr.bf16.mxu0 %v836
    %1043 = vmatpush1.bf16.msra.mxu0 %v835
    %1044 = vmatprep.subr.bf16.mxu0 %v830
    %1045 = vmatpush1.bf16.msra.mxu0 %v829
    %1046 = vmatprep.subr.bf16.mxu0 %v824
    %1047 = vmatpush1.bf16.msra.mxu0 %v823
    %1048 = vmatprep.subr.bf16.mxu0 %v818
    %1049 = vmatpush1.bf16.msra.mxu0 %v817
    %1050 = vmatprep.subr.bf16.mxu0 %v812
    %1051 = vmatpush1.bf16.msra.mxu0 %v811
    %1052 = vmatprep.subr.bf16.mxu0 %v806
    %1053 = vmatpush1.bf16.msra.mxu0 %v805
    %1054 = vmatprep.subr.bf16.mxu0 0
    %1055 = vmatpush2.bf16.msra.mxu0 0
    %1056 = vmatprep.subr.bf16.mxu0 0
    %1057 = vmatpush2.bf16.msra.mxu0 0
    %1058 = vmatprep.subr.bf16.mxu0 0
    %1059 = vmatpush2.bf16.msra.mxu0 0
    %1060 = vmatprep.subr.bf16.mxu0 0
    %1061 = vmatpush2.bf16.msra.mxu0 0
    %1062 = vmatprep.subr.bf16.mxu0 0
    %1063 = vmatpush2.bf16.msra.mxu0 0
    %1064 = vmatprep.subr.bf16.mxu0 0
    %1065 = vmatpush2.bf16.msra.mxu0 0
    %1066 = vmatprep.subr.bf16.mxu0 0
    %1067 = vmatpush2.bf16.msra.mxu0 0
    %1068 = vmatprep.subr.bf16.mxu0 0
    %1069 = vmatpush2.bf16.msra.mxu0 0
    %1070 = vmatprep.mubr.bf16.mxu0 0
    %1071 = vmatmul.mubr.bf16.gmra.mxu0 %v100
    %v1072 = vpop.f32.mrf.mxu0
    %v1073 = vadd.f32 %v1032, %v1072
    %v1074 = vpop.f32.mrf.mxu0
    %v1075 = vadd.f32 %v1034, %v1074
    %v1076 = vpop.f32.mrf.mxu0
    %v1077 = vpop.f32.mrf.mxu0
    %1078 = vdwg.mxu0
    %1079 = vmatprep.subr.bf16.mxu0 %v754
    %1080 = vmatpush1.bf16.msra.mxu0 %v753
    %1081 = vmatprep.subr.bf16.mxu0 %v748
    %1082 = vmatpush1.bf16.msra.mxu0 %v747
    %1083 = vmatprep.subr.bf16.mxu0 %v742
    %1084 = vmatpush1.bf16.msra.mxu0 %v741
    %1085 = vmatprep.subr.bf16.mxu0 %v736
    %1086 = vmatpush1.bf16.msra.mxu0 %v735
    %1087 = vmatprep.subr.bf16.mxu0 %v730
    %1088 = vmatpush1.bf16.msra.mxu0 %v729
    %1089 = vmatprep.subr.bf16.mxu0 %v724
    %1090 = vmatpush1.bf16.msra.mxu0 %v723
    %1091 = vmatprep.subr.bf16.mxu0 %v718
    %1092 = vmatpush1.bf16.msra.mxu0 %v717
    %1093 = vmatprep.subr.bf16.mxu0 %v712
    %1094 = vmatpush1.bf16.msra.mxu0 %v711
    %1095 = vmatprep.subr.bf16.mxu0 %v802
    %1096 = vmatpush2.bf16.msra.mxu0 %v801
    %1097 = vmatprep.subr.bf16.mxu0 %v796
    %1098 = vmatpush2.bf16.msra.mxu0 %v795
    %1099 = vmatprep.subr.bf16.mxu0 %v790
    %1100 = vmatpush2.bf16.msra.mxu0 %v789
    %1101 = vmatprep.subr.bf16.mxu0 %v784
    %1102 = vmatpush2.bf16.msra.mxu0 %v783
    %1103 = vmatprep.subr.bf16.mxu0 %v778
    %1104 = vmatpush2.bf16.msra.mxu0 %v777
    %1105 = vmatprep.subr.bf16.mxu0 %v772
    %1106 = vmatpush2.bf16.msra.mxu0 %v771
    %1107 = vmatprep.subr.bf16.mxu0 %v766
    %1108 = vmatpush2.bf16.msra.mxu0 %v765
    %1109 = vmatprep.subr.bf16.mxu0 %v760
    %1110 = vmatpush2.bf16.msra.mxu0 %v759
    %1111 = vmatprep.mubr.bf16.mxu0 %v99
    %1112 = vmatmul.mubr.bf16.gmra.mxu0 %v98
    %v1113 = vpop.f32.mrf.mxu0
    %v1114 = vadd.f32 %v258, %v1113
    %v1115 = vpop.f32.mrf.mxu0
    %v1116 = vadd.f32 %v262, %v1115
    %v1117 = vpop.f32.mrf.mxu0
    %v1118 = vpop.f32.mrf.mxu0
    %1119 = vdwg.mxu0
    %1120 = vmatprep.subr.bf16.mxu0 %v850
    %1121 = vmatpush1.bf16.msra.mxu0 %v849
    %1122 = vmatprep.subr.bf16.mxu0 %v844
    %1123 = vmatpush1.bf16.msra.mxu0 %v843
    %1124 = vmatprep.subr.bf16.mxu0 %v838
    %1125 = vmatpush1.bf16.msra.mxu0 %v837
    %1126 = vmatprep.subr.bf16.mxu0 %v832
    %1127 = vmatpush1.bf16.msra.mxu0 %v831
    %1128 = vmatprep.subr.bf16.mxu0 %v826
    %1129 = vmatpush1.bf16.msra.mxu0 %v825
    %1130 = vmatprep.subr.bf16.mxu0 %v820
    %1131 = vmatpush1.bf16.msra.mxu0 %v819
    %1132 = vmatprep.subr.bf16.mxu0 %v814
    %1133 = vmatpush1.bf16.msra.mxu0 %v813
    %1134 = vmatprep.subr.bf16.mxu0 %v808
    %1135 = vmatpush1.bf16.msra.mxu0 %v807
    %1136 = vmatprep.subr.bf16.mxu0 0
    %1137 = vmatpush2.bf16.msra.mxu0 0
    %1138 = vmatprep.subr.bf16.mxu0 0
    %1139 = vmatpush2.bf16.msra.mxu0 0
    %1140 = vmatprep.subr.bf16.mxu0 0
    %1141 = vmatpush2.bf16.msra.mxu0 0
    %1142 = vmatprep.subr.bf16.mxu0 0
    %1143 = vmatpush2.bf16.msra.mxu0 0
    %1144 = vmatprep.subr.bf16.mxu0 0
    %1145 = vmatpush2.bf16.msra.mxu0 0
    %1146 = vmatprep.subr.bf16.mxu0 0
    %1147 = vmatpush2.bf16.msra.mxu0 0
    %1148 = vmatprep.subr.bf16.mxu0 0
    %1149 = vmatpush2.bf16.msra.mxu0 0
    %1150 = vmatprep.subr.bf16.mxu0 0
    %1151 = vmatpush2.bf16.msra.mxu0 0
    %1152 = vmatprep.mubr.bf16.mxu0 0
    %1153 = vmatmul.mubr.bf16.gmra.mxu0 %v100
    %v1154 = vpop.f32.mrf.mxu0
    %v1155 = vadd.f32 %v1114, %v1154
    %v1156 = vpop.f32.mrf.mxu0
    %v1157 = vadd.f32 %v1116, %v1156
    %v1158 = vpop.f32.mrf.mxu0
    %v1159 = vpop.f32.mrf.mxu0
    %1160 = vdwg.mxu0
    %1161 = vmatprep.subr.bf16.mxu0 %v756
    %1162 = vmatpush1.bf16.msra.mxu0 %v755
    %1163 = vmatprep.subr.bf16.mxu0 %v750
    %1164 = vmatpush1.bf16.msra.mxu0 %v749
    %1165 = vmatprep.subr.bf16.mxu0 %v744
    %1166 = vmatpush1.bf16.msra.mxu0 %v743
    %1167 = vmatprep.subr.bf16.mxu0 %v738
    %1168 = vmatpush1.bf16.msra.mxu0 %v737
    %1169 = vmatprep.subr.bf16.mxu0 %v732
    %1170 = vmatpush1.bf16.msra.mxu0 %v731
    %1171 = vmatprep.subr.bf16.mxu0 %v726
    %1172 = vmatpush1.bf16.msra.mxu0 %v725
    %1173 = vmatprep.subr.bf16.mxu0 %v720
    %1174 = vmatpush1.bf16.msra.mxu0 %v719
    %1175 = vmatprep.subr.bf16.mxu0 %v714
    %1176 = vmatpush1.bf16.msra.mxu0 %v713
    %1177 = vmatprep.subr.bf16.mxu0 %v804
    %1178 = vmatpush2.bf16.msra.mxu0 %v803
    %1179 = vmatprep.subr.bf16.mxu0 %v798
    %1180 = vmatpush2.bf16.msra.mxu0 %v797
    %1181 = vmatprep.subr.bf16.mxu0 %v792
    %1182 = vmatpush2.bf16.msra.mxu0 %v791
    %1183 = vmatprep.subr.bf16.mxu0 %v786
    %1184 = vmatpush2.bf16.msra.mxu0 %v785
    %1185 = vmatprep.subr.bf16.mxu0 %v780
    %1186 = vmatpush2.bf16.msra.mxu0 %v779
    %1187 = vmatprep.subr.bf16.mxu0 %v774
    %1188 = vmatpush2.bf16.msra.mxu0 %v773
    %1189 = vmatprep.subr.bf16.mxu0 %v768
    %1190 = vmatpush2.bf16.msra.mxu0 %v767
    %1191 = vmatprep.subr.bf16.mxu0 %v762
    %1192 = vmatpush2.bf16.msra.mxu0 %v761
    %1193 = vmatprep.mubr.bf16.mxu0 %v99
    %1194 = vmatmul.mubr.bf16.gmra.mxu0 %v98
    %v1195 = vpop.f32.mrf.mxu0
    %v1196 = vadd.f32 %v266, %v1195
    %v1197 = vpop.f32.mrf.mxu0
    %v1198 = vadd.f32 %v270, %v1197
    %v1199 = vpop.f32.mrf.mxu0
    %v1200 = vpop.f32.mrf.mxu0
    %1201 = vdwg.mxu0
    %1202 = vmatprep.subr.bf16.mxu0 %v852
    %1203 = vmatpush1.bf16.msra.mxu0 %v851
    %1204 = vmatprep.subr.bf16.mxu0 %v846
    %1205 = vmatpush1.bf16.msra.mxu0 %v845
    %1206 = vmatprep.subr.bf16.mxu0 %v840
    %1207 = vmatpush1.bf16.msra.mxu0 %v839
    %1208 = vmatprep.subr.bf16.mxu0 %v834
    %1209 = vmatpush1.bf16.msra.mxu0 %v833
    %1210 = vmatprep.subr.bf16.mxu0 %v828
    %1211 = vmatpush1.bf16.msra.mxu0 %v827
    %1212 = vmatprep.subr.bf16.mxu0 %v822
    %1213 = vmatpush1.bf16.msra.mxu0 %v821
    %1214 = vmatprep.subr.bf16.mxu0 %v816
    %1215 = vmatpush1.bf16.msra.mxu0 %v815
    %1216 = vmatprep.subr.bf16.mxu0 %v810
    %1217 = vmatpush1.bf16.msra.mxu0 %v809
    %1218 = vmatprep.subr.bf16.mxu0 0
    %1219 = vmatpush2.bf16.msra.mxu0 0
    %1220 = vmatprep.subr.bf16.mxu0 0
    %1221 = vmatpush2.bf16.msra.mxu0 0
    %1222 = vmatprep.subr.bf16.mxu0 0
    %1223 = vmatpush2.bf16.msra.mxu0 0
    %1224 = vmatprep.subr.bf16.mxu0 0
    %1225 = vmatpush2.bf16.msra.mxu0 0
    %1226 = vmatprep.subr.bf16.mxu0 0
    %1227 = vmatpush2.bf16.msra.mxu0 0
    %1228 = vmatprep.subr.bf16.mxu0 0
    %1229 = vmatpush2.bf16.msra.mxu0 0
    %1230 = vmatprep.subr.bf16.mxu0 0
    %1231 = vmatpush2.bf16.msra.mxu0 0
    %1232 = vmatprep.subr.bf16.mxu0 0
    %1233 = vmatpush2.bf16.msra.mxu0 0
    %1234 = vmatprep.mubr.bf16.mxu0 0
    %1235 = vmatmul.mubr.bf16.gmra.mxu0 %v100
    %v1236 = vpop.f32.mrf.mxu0
    %v1237 = vadd.f32 %v1196, %v1236
    %v1238 = vpop.f32.mrf.mxu0
    %v1239 = vadd.f32 %v1198, %v1238
    %v1240 = vpop.f32.mrf.mxu0
    %v1241 = vpop.f32.mrf.mxu0
    %1242 = vdwg.mxu0
    %v1243 = vxor.u32 %v1073, 2147483648
    %v1244 = vxor.u32 %v1075, 2147483648
    %v1245 = vxor.u32 %v1155, 2147483648
    %v1246 = vxor.u32 %v1157, 2147483648
    %v1247 = vmul.f32 %v1243, 1.442695
    %v1248 = vpow.pop %v1247
    %v1249 = vmul.f32 %v1244, 1.442695
    %v1250 = vpow.pop %v1249
    %v1251 = vmul.f32 %v1245, 1.442695
    %v1252 = vpow.pop %v1251
    %v1253 = vmul.f32 %v1246, 1.442695
    %v1254 = vpow.pop %v1253
    %v1255 = vadd.f32 %v1248, 1.0
    %v1256 = vadd.f32 %v1250, 1.0
    %v1257 = vadd.f32 %v1252, 1.0
    %v1258 = vadd.f32 %v1254, 1.0
    %v1259 = vrcp.pop %v1255
    %v1260 = vmul.f32 1.0, %v1259
    %v1261 = vrcp.pop %v1256
    %v1262 = vmul.f32 1.0, %v1261
    %v1263 = vrcp.pop %v1257
    %v1264 = vmul.f32 1.0, %v1263
    %v1265 = vrcp.pop %v1258
    %v1266 = vmul.f32 1.0, %v1265
    %v1267 = vmax.f32 %v1237, %v1239
    %v1268 = vld [vmem:[#allocation8] sm:$0xff]
    %v1269 = vmul.f32 %v1262, %v1268
    %v1270 = vmul.f32 %v1260, %v1267
    %v1271 = vadd.f32 %v1269, %v1270
    %v1272 = vtanh.pop %v1271
    %v1273 = vmul.f32 %v1264, %v1272
    %v1274 = vmul.f32 %v1266, %v1272
    %1275 = vst [vmem:[#allocation11] sm:$0xff] %v1273
    %1276 = vst [vmem:[#allocation11 + $0x8] sm:$0xff] %v1272
    %1277 = vst [vmem:[#allocation11 + $0x10] sm:$0xff] %v1274
    // Predicated region
    $region46: #{tpu_custom_call.1} parent=1 // pred_check
      _
    $region47: #{tpu_custom_call.1} parent=1 // pred_check_branch
      %1279 = sbr.rel (0) target = $region49
    $region48: #{tpu_custom_call.1} parent=1 // pred_region
      %s1281 = ssub.s32 384, 384
      %1282 = vsyncadd [#allocation4], %s1281
      %s1284 = sshll.u32 [#allocation11], 4
      %s1285 = int_to_ptr.vmem [resolvable:$true] %s1284
      %1287 = dma.vmem_to_hbm [thread:$0]  %s1285, 384, %s6, [#allocation4]
    $region49: #{tpu_custom_call.1} parent=1 // pred_fallthru
      _
    // Predicated region
    $region50: #{tpu_custom_call.1} parent=1 // pred_check
      _
    $region51: #{tpu_custom_call.1} parent=1 // pred_check_branch
      %1289 = sbr.rel (0) target = $region53
    $region52: #{tpu_custom_call.1} parent=1 // pred_region
      %1290 = dma.done [#allocation4], 384
    $region53: #{tpu_custom_call.1} parent=1 // pred_fallthru
      _
    %1291 = vsyncpa [#allocation3], 1
    %1292 = vsyncpa [#allocation6], 1
    %1293 = vsyncpa [#allocation9], 1
    %1294 = vsyncpa [#allocation4], 1

</llo_original>
